<compile_context>
chip_gen: v5e
topology: v5e:2x2
jax: 0.10.0
libtpu: 0.0.40
codegen_flags: <defaults>
</compile_context>

<pallas_src>
import jax
import jax.numpy as jnp
from jax import lax
from jax.experimental import pallas as pl
from jax.experimental.pallas import tpu as pltpu

_VMEM_LIMIT = 32 * 1024 * 1024  # scoped-VMEM cap safe on v5e / v6e / v7x


# ----------------------------------------------------------------------------
# Tiling helpers
# ----------------------------------------------------------------------------
def _round_up(x, m):
    return (x + m - 1) // m * m


def _pick_tile_and_pad(n, align, candidates=(256, 128)):
    """Pad n up to `align`, then pick the largest candidate tile dividing it."""
    n_al = _round_up(n, align)
    for t in candidates:
        if t <= n_al and n_al % t == 0:
            return n_al, t
    smallest = candidates[-1]
    if n_al <= smallest:
        return n_al, n_al          # single full-extent block
    return _round_up(n_al, smallest), smallest


def _pad2(a, rows, cols):
    pr, pc = rows - a.shape[0], cols - a.shape[1]
    if pr == 0 and pc == 0:
        return a
    return jnp.pad(a, ((0, pr), (0, pc)))


# ----------------------------------------------------------------------------
# Pallas kernels
# ----------------------------------------------------------------------------
def _matmul_kernel(x_ref, w_ref, o_ref, acc_ref):
    # Standard (M, N, K)-blocked matmul: K is the last ("arbitrary") grid axis,
    # f32 accumulator lives in VMEM scratch, bf16 operands feed the MXU.
    @pl.when(pl.program_id(2) == 0)
    def _():
        acc_ref[...] = jnp.zeros_like(acc_ref)

    acc_ref[...] += jnp.dot(
        x_ref[...].astype(jnp.bfloat16),
        w_ref[...].astype(jnp.bfloat16),
        preferred_element_type=jnp.float32,
    )

    @pl.when(pl.program_id(2) == pl.num_programs(2) - 1)
    def _():
        o_ref[...] = acc_ref[...].astype(o_ref.dtype)


def linear_encode(x, w):
    """x: (B, F) f32, w: (F, D) f32 -> (B, D) f32 via blocked Pallas matmul."""
    B, F = x.shape
    F2, D = w.shape
    assert F == F2
    B_pad, tm = _pick_tile_and_pad(B, 8, candidates=(256, 128))
    D_pad, tn = _pick_tile_and_pad(D, 128, candidates=(256, 128))
    F_pad, tk = _pick_tile_and_pad(F, 128, candidates=(512, 256, 128))
    x_p = _pad2(x.astype(jnp.float32), B_pad, F_pad)
    w_p = _pad2(w.astype(jnp.float32), F_pad, D_pad)
    out = pl.pallas_call(
        _matmul_kernel,
        out_shape=jax.ShapeDtypeStruct((B_pad, D_pad), jnp.float32),
        grid=(B_pad // tm, D_pad // tn, F_pad // tk),
        in_specs=[
            pl.BlockSpec((tm, tk), lambda i, j, k: (i, k)),
            pl.BlockSpec((tk, tn), lambda i, j, k: (k, j)),
        ],
        out_specs=pl.BlockSpec((tm, tn), lambda i, j, k: (i, j)),
        scratch_shapes=[pltpu.VMEM((tm, tn), jnp.float32)],
        compiler_params=pltpu.CompilerParams(
            dimension_semantics=("parallel", "parallel", "arbitrary"),
            vmem_limit_bytes=_VMEM_LIMIT),
    )(x_p, w_p)
    return out[:B, :D]


def _cdist_kernel(x_ref, y_ref, xx_ref, yy_ref, o_ref):
    # x: (tB, D) bf16, y: (tR, D) bf16, xx: (tB, 1) f32, yy: (1, tR) f32.
    # mm-based Euclidean distance (matches torch.cdist 'use_mm_for_euclid_dist'):
    # one bf16 Gram matmul on the MXU + f32 broadcast adds on the VPU.
    dn = (((1,), (1,)), ((), ()))  # contract last dims, no batching
    xy = lax.dot_general(x_ref[...], y_ref[...], dn,
                         preferred_element_type=jnp.float32)        # (tB, tR)
    sq = jnp.maximum(xx_ref[...] + yy_ref[...] - 2.0 * xy, 0.0)
    o_ref[...] = jnp.sqrt(sq)


def cdist_pallas(data, reference):
    """Pairwise Euclidean distances: data (B, D), reference (R, D) -> (B, R)."""
    B, D = data.shape
    R, D2 = reference.shape
    assert D == D2
    B_pad, tB = _pick_tile_and_pad(B, 8, candidates=(256, 128))
    R_pad, tR = _pick_tile_and_pad(R, 128, candidates=(512, 256, 128))
    D_pad = _round_up(D, 128)
    # TODO(synk): D is kept un-tiled (fine for D <= ~2048); tile it for larger D.

    # Squared norms precomputed once in f32: removes the redundant
    # ones(B,D) @ (y*y)^T MXU matmul and keeps the cancellation-sensitive
    # xx/yy terms in full precision (only the Gram operands are bf16).
    xx = jnp.sum(data * data, axis=-1, keepdims=True)                # (B, 1)
    yy = jnp.sum(reference * reference, axis=-1)[None, :]            # (1, R)

    x_bf = _pad2(data, B_pad, D_pad).astype(jnp.bfloat16)
    y_bf = _pad2(reference, R_pad, D_pad).astype(jnp.bfloat16)
    xx_p = _pad2(xx, B_pad, 1)
    yy_p = _pad2(yy, 1, R_pad)

    out = pl.pallas_call(
        _cdist_kernel,
        out_shape=jax.ShapeDtypeStruct((B_pad, R_pad), jnp.float32),
        grid=(B_pad // tB, R_pad // tR),
        in_specs=[
            pl.BlockSpec((tB, D_pad), lambda i, j: (i, 0)),
            pl.BlockSpec((tR, D_pad), lambda i, j: (j, 0)),
            pl.BlockSpec((tB, 1), lambda i, j: (i, 0)),
            pl.BlockSpec((1, tR), lambda i, j: (0, j)),
        ],
        out_specs=pl.BlockSpec((tB, tR), lambda i, j: (i, j)),
        compiler_params=pltpu.CompilerParams(
            dimension_semantics=("parallel", "parallel"),
            vmem_limit_bytes=_VMEM_LIMIT),
    )(x_bf, y_bf, xx_p, yy_p)
    return out[:B, :R]


# ----------------------------------------------------------------------------
# Module logic (glue)
# ----------------------------------------------------------------------------
def masked_pairwise_distances(query, reference, diag_offsets):
    """cdist(query, reference) with entries (i, i + off) set to +inf.

    Equivalent (for k-th-smallest selection) to the PyTorch helper that
    deletes those entries: the injected +inf values sort last, so the k-th
    smallest is unchanged for any k < (#columns - #offsets).
    """
    B = query.shape[0]
    d = cdist_pallas(query, reference)
    col = jnp.arange(d.shape[1])[None, :]
    row = jnp.arange(B)[:, None]
    mask = jnp.zeros(d.shape, dtype=bool)
    for off in diag_offsets:
        mask = mask | (col == row + off)
    return jnp.where(mask, jnp.inf, d)


class SimpleCLIPLikeModel:
    """Deterministic synthetic encoder (linear projections run in Pallas)."""

    def __init__(self, key, img_shape, text_feat_dim, embed_dim=128):
        C, H, W = img_shape
        F = C * H * W
        k1, k2 = jax.random.split(key)
        self.w_img = (jax.random.normal(k1, (F, embed_dim), jnp.float32)
                      / jnp.sqrt(F))
        self.w_txt = (jax.random.normal(k2, (text_feat_dim, embed_dim),
                                        jnp.float32) / jnp.sqrt(text_feat_dim))

    def encode_image(self, images):
        B = images.shape[0]
        x = images.reshape(B, -1).astype(jnp.float32)
        return linear_encode(x, self.w_img)

    def encode_text(self, texts):
        return linear_encode(texts.astype(jnp.float32), self.w_txt)


class KDistanceDetector:
    def __init__(self, k=32, gather_distributed=False,
                 compute_mode='use_mm_for_euclid_dist_if_necessary'):
        self.k = k
        self.gather_distributed = gather_distributed
        self.compute_mode = compute_mode
        # TODO(synk): gather_distributed (misc.gather across devices) not
        # implemented; single-device behaviour (rank 0, reference == features).

    def __call__(self, model, images, texts=None):
        vision = model.encode_image(images)                        # (B, D) f32
        B = vision.shape[0]
        if texts is None:
            reference = vision
            diag_offsets = (0,)                                    # drop d[i, i]
        else:
            text = model.encode_text(texts)                        # (T, D)
            # Single fused cdist launch over [vision; text] instead of two.
            reference = jnp.concatenate([vision, text], axis=0)    # (B + T, D)
            # The PyTorch helper removes r[i, i + rank*b] from BOTH the
            # vision-vision and vision-text blocks (rank 0 => offsets 0 and B).
            diag_offsets = (0, B)
        d = masked_pairwise_distances(vision, reference, diag_offsets)
        # TODO(synk): torch.sort has no Pallas/Mosaic lowering; the k-th
        # smallest is selected with lax.top_k (O(R*k)) instead of a full sort.
        neg_topk, _ = lax.top_k(-d, self.k + 1)
        return -neg_topk[:, self.k]


# ----------------------------------------------------------------------------
# Demo
# ----------------------------------------------------------------------------
if __name__ == "__main__":
    key = jax.random.PRNGKey(0)
    k_model, k_img, k_txt = jax.random.split(key, 3)

    B, C, H, W = 8, 4, 16, 16
    TEXT_FEAT = 64
    EMBED = 128

    model = SimpleCLIPLikeModel(k_model, (C, H, W), TEXT_FEAT, EMBED)
    images = jax.random.normal(k_img, (B, C, H, W), jnp.float32)
    texts = jax.random.normal(k_txt, (B, TEXT_FEAT), jnp.float32)

    detector = KDistanceDetector(k=4)

    out_vision_only = detector(model, images)            # (B,)
    out_vision_text = detector(model, images, texts)     # (B,)

    jax.block_until_ready(out_vision_only)
    jax.block_until_ready(out_vision_text)

    assert out_vision_only.shape == (B,)
    assert out_vision_text.shape == (B,)
    assert bool(jnp.all(jnp.isfinite(out_vision_only)))
    assert bool(jnp.all(jnp.isfinite(out_vision_text)))

    print("KERNEL_OK")
</pallas_src>

<mosaic_0001>
module attributes {stable_mosaic.version = 11 : i64} {
  func.func @_matmul_kernel(%arg0: i32, %arg1: i32, %arg2: i32, %arg3: memref<8x512xf32, #tpu.memory_space<vmem>>, %arg4: memref<512x128xf32, #tpu.memory_space<vmem>>, %arg5: memref<8x128xf32, #tpu.memory_space<vmem>>, %arg6: memref<8x128xf32, #tpu.memory_space<vmem>>) attributes {dimension_semantics = [#tpu.dimension_semantics<parallel>, #tpu.dimension_semantics<parallel>, #tpu.dimension_semantics<arbitrary>], iteration_bounds = array<i64: 1, 1, 2>, scalar_prefetch = 0 : i64, scratch_operands = 1 : i64, tpu.core_type = #tpu.core_type<tc>, window_params = [{transform_indices = @transform_0, window_bounds = array<i64: 8, 512>}, {transform_indices = @transform_1, window_bounds = array<i64: 512, 128>}, {transform_indices = @transform_2, window_bounds = array<i64: 8, 128>}]} {
    %c0_i32 = arith.constant 0 : i32
    %0 = arith.cmpi eq, %arg2, %c0_i32 : i32
    %1 = arith.extui %0 : i1 to i32
    %c0_i32_0 = arith.constant 0 : i32
    %2 = arith.cmpi ne, %1, %c0_i32_0 : i32
    scf.if %2 {
      %cst_9 = arith.constant 0.000000e+00 : f32
      %14 = vector.broadcast %cst_9 : f32 to vector<8x128xf32>
      %c0_10 = arith.constant 0 : index
      %c0_11 = arith.constant 0 : index
      %15 = vector.load %arg6[%c0_10, %c0_11] : memref<8x128xf32, #tpu.memory_space<vmem>>, vector<8x128xf32>
      tpu.vector_store %arg6[%c0_10, %c0_11], %14 {strides = array<i32>} : memref<8x128xf32, #tpu.memory_space<vmem>>, vector<8x128xf32>,
    } else {
    }
    %c0 = arith.constant 0 : index
    %c0_1 = arith.constant 0 : index
    %3 = vector.load %arg6[%c0, %c0_1] : memref<8x128xf32, #tpu.memory_space<vmem>>, vector<8x128xf32>
    %c0_2 = arith.constant 0 : index
    %c0_3 = arith.constant 0 : index
    %4 = vector.load %arg3[%c0_2, %c0_3] : memref<8x512xf32, #tpu.memory_space<vmem>>, vector<8x512xf32>
    %5 = arith.truncf %4 : vector<8x512xf32> to vector<8x512xbf16>
    %c0_4 = arith.constant 0 : index
    %c0_5 = arith.constant 0 : index
    %6 = vector.load %arg4[%c0_4, %c0_5] : memref<512x128xf32, #tpu.memory_space<vmem>>, vector<512x128xf32>
    %7 = arith.truncf %6 : vector<512x128xf32> to vector<512x128xbf16>
    %cst = arith.constant dense<0.000000e+00> : vector<8x128xf32>
    %8 = tpu.matmul %5, %7, %cst {dimension_numbers = #tpu.dot_dimension_numbers<[1], [0], [0], [1], [0, 0, 1, 1], [], []>} : vector<8x512xbf16>, vector<512x128xbf16>, vector<8x128xf32> -> vector<8x128xf32>
    %9 = arith.addf %3, %8 : vector<8x128xf32>
    %c0_6 = arith.constant 0 : index
    %c0_7 = arith.constant 0 : index
    %10 = vector.load %arg6[%c0_6, %c0_7] : memref<8x128xf32, #tpu.memory_space<vmem>>, vector<8x128xf32>
    tpu.vector_store %arg6[%c0_6, %c0_7], %9 {strides = array<i32>} : memref<8x128xf32, #tpu.memory_space<vmem>>, vector<8x128xf32>,
    %c1_i32 = arith.constant 1 : i32
    %11 = arith.cmpi eq, %arg2, %c1_i32 : i32
    %12 = arith.extui %11 : i1 to i32
    %c0_i32_8 = arith.constant 0 : i32
    %13 = arith.cmpi ne, %12, %c0_i32_8 : i32
    scf.if %13 {
      %c0_9 = arith.constant 0 : index
      %c0_10 = arith.constant 0 : index
      %14 = vector.load %arg6[%c0_9, %c0_10] : memref<8x128xf32, #tpu.memory_space<vmem>>, vector<8x128xf32>
      %c0_11 = arith.constant 0 : index
      %c0_12 = arith.constant 0 : index
      %15 = vector.load %arg5[%c0_11, %c0_12] : memref<8x128xf32, #tpu.memory_space<vmem>>, vector<8x128xf32>
      tpu.vector_store %arg5[%c0_11, %c0_12], %14 {strides = array<i32>} : memref<8x128xf32, #tpu.memory_space<vmem>>, vector<8x128xf32>,
    } else {
    }
    return
  }
  func.func @transform_0(%arg0: i32, %arg1: i32, %arg2: i32) -> (i32, i32) {
    %c0_i32 = arith.constant 0 : i32
    return %arg0, %arg2 : i32, i32
  }
  func.func @transform_1(%arg0: i32, %arg1: i32, %arg2: i32) -> (i32, i32) {
    %c0_i32 = arith.constant 0 : i32
    return %arg2, %arg1 : i32, i32
  }
  func.func @transform_2(%arg0: i32, %arg1: i32, %arg2: i32) -> (i32, i32) {
    %c0_i32 = arith.constant 0 : i32
    return %arg0, %arg1 : i32, i32
  }
}

</mosaic_0001>

<llo_original>
// kernel: tpu_custom_call.1
$region0: #{tpu_custom_call.1}
  #allocation0 [shape = 'u32[]', space=smem, size = 0x4, offset = 0x4, fixed_abs, tag = 'smem constant byte address 0x4 - core index']
  #allocation1 [shape = 'u32[72,128]{1,0:T(1,128)}', space=vmem, size = 0x9000, scoped, tag = 'internal scratch']
  #allocation2 [shape = 'f32[8,128]{1,0:T(8,128)}', space=vmem, size = 0x1000, scoped, tag = 'scratch operand']
  %s0 = inlined_call_operand.hbm [shape: f32[8,1024], index: 0, kind: input, shape index: {}]
  %s1 = inlined_call_operand.hbm [shape: f32[1024,128], index: 1, kind: input, shape index: {}]
  %s2 = inlined_call_operand.hbm [shape: f32[8,128], index: 2, kind: output, shape index: {}]
  %s3 = sld [smem:[#allocation0]]
  $region57: #{tpu_custom_call.1} parent=0
    _
  %s5 = ssub.s32 1, %s3
  %s6 = scalar_select 0, %s5, %s3
  $region1: #{tpu_custom_call.1} parent=0
    #allocation3 [shape = 'u8[32768]{0}', space=vmem, size = 0x8000, scoped, tag = 'input window, operand 0']
    #allocation4 [shape = 's32[2]{0}', space=sflag, size = 0x8, scoped, tag = 'scoped memory for tpu_custom_call.1']
    #allocation5 [shape = 's32[2]{0}', space=sflag, size = 0x8, scoped, tag = 'scoped memory for tpu_custom_call.1']
    #allocation6 [shape = 'u8[524288]{0}', space=vmem, size = 0x80000, scoped, tag = 'input window, operand 1']
    #allocation7 [shape = 's32[2]{0}', space=sflag, size = 0x8, scoped, tag = 'scoped memory for tpu_custom_call.1']
    #allocation8 [shape = 'u8[4096]{0}', space=vmem, size = 0x1000, scoped, tag = 'output window, operand 0, single buffered']
    %7 = vsyncpa [#allocation4], 0
    %s8 = scalar_lea.sflag [#allocation4], 1
    %9 = vsyncpa %s8, 0
    %10 = vsyncpa [#allocation7], 0
    %s11 = scalar_lea.sflag [#allocation7], 1
    %12 = vsyncpa %s11, 0
    %13 = vsyncpa [#allocation5], 0
    loop: start=0, step=1, limit=4
    $region2: #{tpu_custom_call.1} parent=1 // loop_pre_header
      _
    $region3: #{tpu_custom_call.1} parent=1 // loop_header
      %s15 = sphi 0, %s19
      %p16 = scmp.ge.s32.totalorder %s15, 4
      %s22 = sphi 0, %s41
      %s23 = sphi 0, %s37
      %s24 = sphi 0, %s33
      %s25 = sphi 0, %s22
      %s26 = sphi 0, %s23
      %s27 = sphi 0, %s24
      %s28 = sphi 0, %s25
      %s29 = sphi 0, %s26
      %s30 = sphi 0, %s27
      %s46 = sphi 0, %s48
      %s49 = sphi 0, %s46
      %s50 = sphi 0, %s49
      %s66 = sphi 0, %s50
      %s74 = sphi 0, %s76
      %s77 = sphi 0, %s74
      %s78 = sphi 0, %s77
      %s94 = sphi 0, %s78
      %s102 = sphi 0, %s104
      %s105 = sphi 0, %s102
      %s106 = sphi 0, %s105
      %s122 = sphi 0, %s106
    $region4: #{tpu_custom_call.1} parent=1 // loop_header_branch
      %18 = sbr.rel (%p16) target = $region8
    $region5: #{tpu_custom_call.1} parent=1 // loop_body
      %s20 = ssub.s32 %s15, 1
      %s21 = ssub.s32 %s15, 2
      %s31 = sadd.s32 1, %s24
      %p32 = scmp.ge.s32.totalorder %s31, 2
      %s33 = scalar_select %p32, 0, %s31
      %s34 = sadd.s32 1, %s23
      %s35 = scalar_select %p32, %s34, %s23
      %p36 = scmp.ge.s32.totalorder %s35, 1
      %s37 = scalar_select %p36, 0, %s35
      %s38 = sadd.s32 1, %s22
      %s39 = scalar_select %p36, %s38, %s22
      %p40 = scmp.ge.s32.totalorder %s39, 1
      %s41 = scalar_select %p40, 0, %s39
      %s42 = ssub.s32 %s22, %s41
      %s43 = ssub.s32 %s24, %s33
      %s44 = sor.u32 %s42, %s43
      %p45 = scmp.eq.s32.totalorder %s44, 0
      %s47 = sadd.s32 %s46, 1
      %s48 = scalar_select %p45, %s46, %s47
      %p51 = pneg %p45
      %p52 = scmp.eq.s32.totalorder %s15, 1
      %p53 = por %p51, %p52
      %p54 = scmp.ne.s32.totalorder %s46, %s49
      %p55 = scmp.eq.s32.totalorder %s15, 0
      %p56 = por %p54, %p55
      %p57 = scmp.ne.s32.totalorder %s46, %s49
      %p58 = scmp.eq.s32.totalorder %s20, 1
      %p59 = por %p57, %p58
      %p60 = scmp.ne.s32.totalorder %s49, %s50
      %p61 = scmp.eq.s32.totalorder %s20, 0
      %p62 = por %p60, %p61
      %p63 = scmp.ne.s32.totalorder %s49, %s50
      %p64 = scmp.eq.s32.totalorder %s21, 1
      %p65 = por %p63, %p64
      %p67 = scmp.ne.s32.totalorder %s50, %s66
      %p68 = scmp.eq.s32.totalorder %s21, 0
      %p69 = por %p67, %p68
      %s70 = ssub.s32 %s24, %s33
      %s71 = ssub.s32 %s23, %s37
      %s72 = sor.u32 %s70, %s71
      %p73 = scmp.eq.s32.totalorder %s72, 0
      %s75 = sadd.s32 %s74, 1
      %s76 = scalar_select %p73, %s74, %s75
      %p79 = pneg %p73
      %p80 = scmp.eq.s32.totalorder %s15, 1
      %p81 = por %p79, %p80
      %p82 = scmp.ne.s32.totalorder %s74, %s77
      %p83 = scmp.eq.s32.totalorder %s15, 0
      %p84 = por %p82, %p83
      %p85 = scmp.ne.s32.totalorder %s74, %s77
      %p86 = scmp.eq.s32.totalorder %s20, 1
      %p87 = por %p85, %p86
      %p88 = scmp.ne.s32.totalorder %s77, %s78
      %p89 = scmp.eq.s32.totalorder %s20, 0
      %p90 = por %p88, %p89
      %p91 = scmp.ne.s32.totalorder %s77, %s78
      %p92 = scmp.eq.s32.totalorder %s21, 1
      %p93 = por %p91, %p92
      %p95 = scmp.ne.s32.totalorder %s78, %s94
      %p96 = scmp.eq.s32.totalorder %s21, 0
      %p97 = por %p95, %p96
      %s98 = ssub.s32 %s22, %s41
      %s99 = ssub.s32 %s23, %s37
      %s100 = sor.u32 %s98, %s99
      %p101 = scmp.eq.s32.totalorder %s100, 0
      %s103 = sadd.s32 %s102, 1
      %s104 = scalar_select %p101, %s102, %s103
      %p107 = pneg %p101
      %p108 = scmp.eq.s32.totalorder %s15, 1
      %p109 = por %p107, %p108
      %p110 = scmp.ne.s32.totalorder %s102, %s105
      %p111 = scmp.eq.s32.totalorder %s15, 0
      %p112 = por %p110, %p111
      %p113 = scmp.ne.s32.totalorder %s102, %s105
      %p114 = scmp.eq.s32.totalorder %s20, 1
      %p115 = por %p113, %p114
      %p116 = scmp.ne.s32.totalorder %s105, %s106
      %p117 = scmp.eq.s32.totalorder %s20, 0
      %p118 = por %p116, %p117
      %p119 = scmp.ne.s32.totalorder %s105, %s106
      %p120 = scmp.eq.s32.totalorder %s21, 1
      %p121 = por %p119, %p120
      %p123 = scmp.ne.s32.totalorder %s106, %s122
      %p124 = scmp.eq.s32.totalorder %s21, 0
      %p125 = por %p123, %p124
      %p126 = scmp.le.s32.totalorder 1, %s15
      %p127 = scmp.lt.s32.totalorder %s15, 3
      %p128 = pnand %p126, %p127
      %p129 = pneg %p128
      // Predicated region
      $region9: #{tpu_custom_call.1} parent=5 // pred_check
        _
      $region10: #{tpu_custom_call.1} parent=5 // pred_check_branch
        %131 = sbr.rel (%p128) target = $region12
      $region11: #{tpu_custom_call.1} parent=5 // pred_region
        %s132 = ssub.s32 %s15, 1
      $region12: #{tpu_custom_call.1} parent=5 // pred_fallthru
        _
      %p133 = scmp.lt.s32.totalorder %s15, 2
      // Predicated region
      $region13: #{tpu_custom_call.1} parent=5 // pred_check
        %p134 = pneg %p133
      $region14: #{tpu_custom_call.1} parent=5 // pred_check_branch
        %136 = sbr.rel (%p134) target = $region16
      $region15: #{tpu_custom_call.1} parent=5 // pred_region
        // Predicated region
        $region17: #{tpu_custom_call.1} parent=15 // pred_check
          %p137 = pneg %p56
        $region18: #{tpu_custom_call.1} parent=15 // pred_check_branch
          %139 = sbr.rel (%p137) target = $region20
        $region19: #{tpu_custom_call.1} parent=15 // pred_region
          %s140 = sand.u32 %s46, 1
          %s141 = scalar_lea.sflag [#allocation4], %s140
          %s142 = sand.u32 %s46, 1
          %s143 = smul.addr %s142, 32
          %s144 = scalar_lea.vmem [#allocation3], %s143
          %s145 = smul.u32 4, %s24
          %147 = vsyncadd %s141, 0
          %s148 = smul.addr %s22, 8
          %s149 = sadd.s32 %s145, %s148
          %s150 = smul.addr %s149, 8
          %s151 = scalar_lea.hbm %s0, %s150
          %s153 = sshll.u32 %s151, 4
          %s154 = int_to_ptr.hbm [resolvable:$true] %s153
          %s155 = sshll.u32 %s144, 4
          %s156 = int_to_ptr.vmem [resolvable:$true] %s155
          %158 = dma.hbm_to_vmem [thread:$0]  %s154, 512, %s156, %s141
        $region20: #{tpu_custom_call.1} parent=15 // pred_fallthru
          _
        // Predicated region
        $region21: #{tpu_custom_call.1} parent=15 // pred_check
          %p159 = pneg %p84
        $region22: #{tpu_custom_call.1} parent=15 // pred_check_branch
          %161 = sbr.rel (%p159) target = $region24
        $region23: #{tpu_custom_call.1} parent=15 // pred_region
          %s162 = sand.u32 %s74, 1
          %s163 = scalar_lea.sflag [#allocation7], %s162
          %s164 = sand.u32 %s74, 1
          %s165 = smul.addr %s164, 512
          %s166 = scalar_lea.vmem [#allocation6], %s165
          %s167 = smul.u32 64, %s24
          %169 = vsyncadd %s163, 0
          %s170 = sadd.s32 %s23, %s167
          %s171 = smul.addr %s170, 8
          %s172 = scalar_lea.hbm %s1, %s171
          %s173 = sshll.u32 %s172, 4
          %s174 = int_to_ptr.hbm [resolvable:$true] %s173
          %s175 = sshll.u32 %s166, 4
          %s176 = int_to_ptr.vmem [resolvable:$true] %s175
          %181 = dma.hbm_to_vmem [thread:$0]  %s174, 8192, %s176, %s163, 128, 128, 8
        $region24: #{tpu_custom_call.1} parent=15 // pred_fallthru
          _
      $region16: #{tpu_custom_call.1} parent=5 // pred_fallthru
        _
      %p182 = scmp.le.s32.totalorder 1, %s15
      %p183 = scmp.lt.s32.totalorder %s15, 3
      %p184 = pnand %p182, %p183
      %p185 = pneg %p184
      // Predicated region
      $region25: #{tpu_custom_call.1} parent=5 // pred_check
        _
      $region26: #{tpu_custom_call.1} parent=5 // pred_check_branch
        %187 = sbr.rel (%p184) target = $region28
      $region27: #{tpu_custom_call.1} parent=5 // pred_region
        %s188 = ssub.s32 %s15, 1
        %s189 = sand.u32 %s49, 1
        %s190 = scalar_lea.sflag [#allocation4], %s189
        %s191 = sand.u32 %s49, 1
        %s192 = smul.addr %s191, 32
        %s193 = scalar_lea.vmem [#allocation3], %s192
        // Predicated region
        $region29: #{tpu_custom_call.1} parent=27 // pred_check
          %p194 = pneg %p62
        $region30: #{tpu_custom_call.1} parent=27 // pred_check_branch
          %196 = sbr.rel (%p194) target = $region32
        $region31: #{tpu_custom_call.1} parent=27 // pred_region
          %198 = dma.done %s190, 512
        $region32: #{tpu_custom_call.1} parent=27 // pred_fallthru
          _
        %s199 = sand.u32 %s77, 1
        %s200 = scalar_lea.sflag [#allocation7], %s199
        %s201 = sand.u32 %s77, 1
        %s202 = smul.addr %s201, 512
        %s203 = scalar_lea.vmem [#allocation6], %s202
        // Predicated region
        $region33: #{tpu_custom_call.1} parent=27 // pred_check
          %p204 = pneg %p90
        $region34: #{tpu_custom_call.1} parent=27 // pred_check_branch
          %206 = sbr.rel (%p204) target = $region36
        $region35: #{tpu_custom_call.1} parent=27 // pred_region
          %208 = dma.done %s200, 8192
        $region36: #{tpu_custom_call.1} parent=27 // pred_fallthru
          _
        %s209 = sand.u32 %s49, 1
        %s210 = scalar_lea.sflag [#allocation4], %s209
        %s211 = sand.u32 %s49, 1
        %s212 = smul.addr %s211, 32
        %s213 = scalar_lea.vmem [#allocation3], %s212
        %p214 = pneg %p62
        %p215 = pneg %p59
        %s216 = sand.u32 %s77, 1
        %s217 = scalar_lea.sflag [#allocation7], %s216
        %s218 = sand.u32 %s77, 1
        %s219 = smul.addr %s218, 512
        %s220 = scalar_lea.vmem [#allocation6], %s219
        %p221 = pneg %p90
        %p222 = pneg %p87
        %p223 = pneg %p118
        %p224 = pneg %p115
        %s225 = smul.u32 4, %s27
        %s226 = smul.u32 64, %s27
        %p227 = scmp.eq.s32.totalorder %s27, 0
        // Predicated region
        $region37: #{tpu_custom_call.1} parent=27 // pred_check
          %p228 = pneg %p227
        $region38: #{tpu_custom_call.1} parent=27 // pred_check_branch
          %230 = sbr.rel (%p228) target = $region40
        $region39: #{tpu_custom_call.1} parent=27 // pred_region
          %231 = vst [vmem:[#allocation2] sm:$0xff] 0.0
        $region40: #{tpu_custom_call.1} parent=27 // pred_fallthru
          _
        %v232 = vld [vmem:[#allocation2] sm:$0xff]
        %v233 = vld [vmem:[%s193] sm:$0xff]
        %v234 = vld [vmem:[%s193 + $0x8] sm:$0xff]
        %v235 = vld [vmem:[%s193 + $0x10] sm:$0xff]
        %v236 = vld [vmem:[%s193 + $0x18] sm:$0xff]
        %v237 = vpack.c.bf16 %v233, %v233
        %v238 = vpack.c.bf16 %v234, %v234
        %v239 = vpack.c.bf16 %v235, %v235
        %v240 = vpack.c.bf16 %v236, %v236
        %v241 = vld [vmem:[%s203] sm:$0xff]
        %v242 = vld [vmem:[%s203 + $0x8] sm:$0xff]
        %v243 = vld [vmem:[%s203 + $0x10] sm:$0xff]
        %v244 = vld [vmem:[%s203 + $0x18] sm:$0xff]
        %v245 = vld [vmem:[%s203 + $0x20] sm:$0xff]
        %v246 = vld [vmem:[%s203 + $0x28] sm:$0xff]
        %v247 = vld [vmem:[%s203 + $0x30] sm:$0xff]
        %v248 = vld [vmem:[%s203 + $0x38] sm:$0xff]
        %v249 = vld [vmem:[%s203 + $0x40] sm:$0xff]
        %v250 = vld [vmem:[%s203 + $0x48] sm:$0xff]
        %v251 = vld [vmem:[%s203 + $0x50] sm:$0xff]
        %v252 = vld [vmem:[%s203 + $0x58] sm:$0xff]
        %v253 = vld [vmem:[%s203 + $0x60] sm:$0xff]
        %v254 = vld [vmem:[%s203 + $0x68] sm:$0xff]
        %v255 = vld [vmem:[%s203 + $0x70] sm:$0xff]
        %v256 = vld [vmem:[%s203 + $0x78] sm:$0xff]
        %v257 = vld [vmem:[%s203 + $0x80] sm:$0xff]
        %v258 = vld [vmem:[%s203 + $0x88] sm:$0xff]
        %v259 = vld [vmem:[%s203 + $0x90] sm:$0xff]
        %v260 = vld [vmem:[%s203 + $0x98] sm:$0xff]
        %v261 = vld [vmem:[%s203 + $0xa0] sm:$0xff]
        %v262 = vld [vmem:[%s203 + $0xa8] sm:$0xff]
        %v263 = vld [vmem:[%s203 + $0xb0] sm:$0xff]
        %v264 = vld [vmem:[%s203 + $0xb8] sm:$0xff]
        %v265 = vld [vmem:[%s203 + $0xc0] sm:$0xff]
        %v266 = vld [vmem:[%s203 + $0xc8] sm:$0xff]
        %v267 = vld [vmem:[%s203 + $0xd0] sm:$0xff]
        %v268 = vld [vmem:[%s203 + $0xd8] sm:$0xff]
        %v269 = vld [vmem:[%s203 + $0xe0] sm:$0xff]
        %v270 = vld [vmem:[%s203 + $0xe8] sm:$0xff]
        %v271 = vld [vmem:[%s203 + $0xf0] sm:$0xff]
        %v272 = vld [vmem:[%s203 + $0xf8] sm:$0xff]
        %v273 = vld [vmem:[%s203 + $0x100] sm:$0xff]
        %v274 = vld [vmem:[%s203 + $0x108] sm:$0xff]
        %v275 = vld [vmem:[%s203 + $0x110] sm:$0xff]
        %v276 = vld [vmem:[%s203 + $0x118] sm:$0xff]
        %v277 = vld [vmem:[%s203 + $0x120] sm:$0xff]
        %v278 = vld [vmem:[%s203 + $0x128] sm:$0xff]
        %v279 = vld [vmem:[%s203 + $0x130] sm:$0xff]
        %v280 = vld [vmem:[%s203 + $0x138] sm:$0xff]
        %v281 = vld [vmem:[%s203 + $0x140] sm:$0xff]
        %v282 = vld [vmem:[%s203 + $0x148] sm:$0xff]
        %v283 = vld [vmem:[%s203 + $0x150] sm:$0xff]
        %v284 = vld [vmem:[%s203 + $0x158] sm:$0xff]
        %v285 = vld [vmem:[%s203 + $0x160] sm:$0xff]
        %v286 = vld [vmem:[%s203 + $0x168] sm:$0xff]
        %v287 = vld [vmem:[%s203 + $0x170] sm:$0xff]
        %v288 = vld [vmem:[%s203 + $0x178] sm:$0xff]
        %v289 = vld [vmem:[%s203 + $0x180] sm:$0xff]
        %v290 = vld [vmem:[%s203 + $0x188] sm:$0xff]
        %v291 = vld [vmem:[%s203 + $0x190] sm:$0xff]
        %v292 = vld [vmem:[%s203 + $0x198] sm:$0xff]
        %v293 = vld [vmem:[%s203 + $0x1a0] sm:$0xff]
        %v294 = vld [vmem:[%s203 + $0x1a8] sm:$0xff]
        %v295 = vld [vmem:[%s203 + $0x1b0] sm:$0xff]
        %v296 = vld [vmem:[%s203 + $0x1b8] sm:$0xff]
        %v297 = vld [vmem:[%s203 + $0x1c0] sm:$0xff]
        %v298 = vld [vmem:[%s203 + $0x1c8] sm:$0xff]
        %v299 = vld [vmem:[%s203 + $0x1d0] sm:$0xff]
        %v300 = vld [vmem:[%s203 + $0x1d8] sm:$0xff]
        %v301 = vld [vmem:[%s203 + $0x1e0] sm:$0xff]
        %v302 = vld [vmem:[%s203 + $0x1e8] sm:$0xff]
        %v303 = vld [vmem:[%s203 + $0x1f0] sm:$0xff]
        %v304 = vld [vmem:[%s203 + $0x1f8] sm:$0xff]
        %v305 = vpack.c.bf16 %v242, %v241
        %v306 = vpack.c.bf16 %v244, %v243
        %v307 = vpack.c.bf16 %v246, %v245
        %v308 = vpack.c.bf16 %v248, %v247
        %v309 = vpack.c.bf16 %v250, %v249
        %v310 = vpack.c.bf16 %v252, %v251
        %v311 = vpack.c.bf16 %v254, %v253
        %v312 = vpack.c.bf16 %v256, %v255
        %v313 = vpack.c.bf16 %v258, %v257
        %v314 = vpack.c.bf16 %v260, %v259
        %v315 = vpack.c.bf16 %v262, %v261
        %v316 = vpack.c.bf16 %v264, %v263
        %v317 = vpack.c.bf16 %v266, %v265
        %v318 = vpack.c.bf16 %v268, %v267
        %v319 = vpack.c.bf16 %v270, %v269
        %v320 = vpack.c.bf16 %v272, %v271
        %v321 = vpack.c.bf16 %v274, %v273
        %v322 = vpack.c.bf16 %v276, %v275
        %v323 = vpack.c.bf16 %v278, %v277
        %v324 = vpack.c.bf16 %v280, %v279
        %v325 = vpack.c.bf16 %v282, %v281
        %v326 = vpack.c.bf16 %v284, %v283
        %v327 = vpack.c.bf16 %v286, %v285
        %v328 = vpack.c.bf16 %v288, %v287
        %v329 = vpack.c.bf16 %v290, %v289
        %v330 = vpack.c.bf16 %v292, %v291
        %v331 = vpack.c.bf16 %v294, %v293
        %v332 = vpack.c.bf16 %v296, %v295
        %v333 = vpack.c.bf16 %v298, %v297
        %v334 = vpack.c.bf16 %v300, %v299
        %v335 = vpack.c.bf16 %v302, %v301
        %v336 = vpack.c.bf16 %v304, %v303
        %337 = vmatpush.bf16.msra.mxu0 %v312
        %338 = vmatpush.bf16.msra.mxu0 %v311
        %339 = vmatpush.bf16.msra.mxu0 %v310
        %340 = vmatpush.bf16.msra.mxu0 %v309
        %341 = vmatpush.bf16.msra.mxu0 %v308
        %342 = vmatpush.bf16.msra.mxu0 %v307
        %343 = vmatpush.bf16.msra.mxu0 %v306
        %344 = vmatpush.bf16.msra.mxu0 %v305
        %345 = vmatmul.bf16.gmra.mxu0 %v237
        %v346 = vpop.f32.mrf.mxu0
        %v347 = vadd.f32 0.0, %v346
        %v348 = vpop.f32.mrf.mxu0
        %349 = vdwg.mxu0
        %350 = vmatpush.bf16.msra.mxu0 %v320
        %351 = vmatpush.bf16.msra.mxu0 %v319
        %352 = vmatpush.bf16.msra.mxu0 %v318
        %353 = vmatpush.bf16.msra.mxu0 %v317
        %354 = vmatpush.bf16.msra.mxu0 %v316
        %355 = vmatpush.bf16.msra.mxu0 %v315
        %356 = vmatpush.bf16.msra.mxu0 %v314
        %357 = vmatpush.bf16.msra.mxu0 %v313
        %358 = vmatmul.bf16.gmra.mxu0 %v238
        %v359 = vpop.f32.mrf.mxu0
        %v360 = vadd.f32 %v347, %v359
        %v361 = vpop.f32.mrf.mxu0
        %362 = vdwg.mxu0
        %363 = vmatpush.bf16.msra.mxu0 %v328
        %364 = vmatpush.bf16.msra.mxu0 %v327
        %365 = vmatpush.bf16.msra.mxu0 %v326
        %366 = vmatpush.bf16.msra.mxu0 %v325
        %367 = vmatpush.bf16.msra.mxu0 %v324
        %368 = vmatpush.bf16.msra.mxu0 %v323
        %369 = vmatpush.bf16.msra.mxu0 %v322
        %370 = vmatpush.bf16.msra.mxu0 %v321
        %371 = vmatmul.bf16.gmra.mxu0 %v239
        %v372 = vpop.f32.mrf.mxu0
        %v373 = vadd.f32 %v360, %v372
        %v374 = vpop.f32.mrf.mxu0
        %375 = vdwg.mxu0
        %376 = vmatpush.bf16.msra.mxu0 %v336
        %377 = vmatpush.bf16.msra.mxu0 %v335
        %378 = vmatpush.bf16.msra.mxu0 %v334
        %379 = vmatpush.bf16.msra.mxu0 %v333
        %380 = vmatpush.bf16.msra.mxu0 %v332
        %381 = vmatpush.bf16.msra.mxu0 %v331
        %382 = vmatpush.bf16.msra.mxu0 %v330
        %383 = vmatpush.bf16.msra.mxu0 %v329
        %384 = vmatmul.bf16.gmra.mxu0 %v240
        %v385 = vpop.f32.mrf.mxu0
        %v386 = vadd.f32 %v373, %v385
        %v387 = vpop.f32.mrf.mxu0
        %388 = vdwg.mxu0
        %v389 = vadd.f32 %v232, %v386
        %390 = vst [vmem:[#allocation2] sm:$0xff] %v389
        %p391 = scmp.eq.s32.totalorder %s27, 1
        // Predicated region
        $region41: #{tpu_custom_call.1} parent=27 // pred_check
          %p392 = pneg %p391
        $region42: #{tpu_custom_call.1} parent=27 // pred_check_branch
          %394 = sbr.rel (%p392) target = $region44
        $region43: #{tpu_custom_call.1} parent=27 // pred_region
          %v395 = vld [vmem:[#allocation2] sm:$0xff]
          %396 = vst [vmem:[#allocation8] sm:$0xff] %v395
        $region44: #{tpu_custom_call.1} parent=27 // pred_fallthru
          _
        // Predicated region
        $region45: #{tpu_custom_call.1} parent=27 // pred_check
          %p397 = pneg %p115
        $region46: #{tpu_custom_call.1} parent=27 // pred_check_branch
          %399 = sbr.rel (%p397) target = $region48
        $region47: #{tpu_custom_call.1} parent=27 // pred_region
          %401 = vsyncadd [#allocation5], 0
          %s402 = sadd.s32 %s26, %s25
          %s403 = smul.addr %s402, 8
          %s404 = scalar_lea.hbm %s2, %s403
          %s406 = sshll.u32 [#allocation8], 4
          %s407 = int_to_ptr.vmem [resolvable:$true] %s406
          %s408 = sshll.u32 %s404, 4
          %s409 = int_to_ptr.hbm [resolvable:$true] %s408
          %411 = dma.vmem_to_hbm [thread:$0]  %s407, 128, %s409, [#allocation5]
        $region48: #{tpu_custom_call.1} parent=27 // pred_fallthru
          _
        // Predicated region
        $region49: #{tpu_custom_call.1} parent=27 // pred_check
          %p412 = pneg %p115
        $region50: #{tpu_custom_call.1} parent=27 // pred_check_branch
          %414 = sbr.rel (%p412) target = $region52
        $region51: #{tpu_custom_call.1} parent=27 // pred_region
          %416 = dma.done [#allocation5], 128
        $region52: #{tpu_custom_call.1} parent=27 // pred_fallthru
          _
      $region28: #{tpu_custom_call.1} parent=5 // pred_fallthru
        _
      %p417 = scmp.le.s32.totalorder 2, %s15
      // Predicated region
      $region53: #{tpu_custom_call.1} parent=5 // pred_check
        %p418 = pneg %p417
      $region54: #{tpu_custom_call.1} parent=5 // pred_check_branch
        %420 = sbr.rel (%p418) target = $region56
      $region55: #{tpu_custom_call.1} parent=5 // pred_region
        %s421 = ssub.s32 %s15, 2
      $region56: #{tpu_custom_call.1} parent=5 // pred_fallthru
        _
    $region6: #{tpu_custom_call.1} parent=1 // loop_footer
      %s19 = sadd.s32 1, %s15
    $region7: #{tpu_custom_call.1} parent=1 // loop_footer_branch
      %14 = sbr.rel target = $region3
    $region8: #{tpu_custom_call.1} parent=1 // loop_exit
      _
    %422 = vsyncpa [#allocation4], 1
    %s423 = scalar_lea.sflag [#allocation4], 1
    %424 = vsyncpa %s423, 1
    %425 = vsyncpa [#allocation7], 1
    %s426 = scalar_lea.sflag [#allocation7], 1
    %427 = vsyncpa %s426, 1
    %428 = vsyncpa [#allocation5], 1
    %s429 = scalar_lea.sflag [#allocation5], 1
    %430 = vsyncpa %s429, 1

</llo_original>
